<compile_context>
chip_gen: v7x
topology: tpu7x:2x2x1
jax: 0.10.0
libtpu: 0.0.40
codegen_flags: <defaults>
</compile_context>

<pallas_src>
import functools

import jax
import jax.numpy as jnp
from jax.experimental import pallas as pl
from jax.experimental.pallas import tpu as pltpu


_MASK_VALUE = -1e9                    # applied once via where() -> no -inf arithmetic
_VMEM_LIMIT = 32 * 1024 * 1024        # = v6e/v7x scoped default; raises v5e's 16 MiB
_LM_TILE = 2048                       # vocab tile target (multiple of 256)
_FFN_TILE = 512                       # hidden (F) tile target (v5e-safe)
_LIN_TILE = 768                       # output-N tile target for projections
_KV_TILE = 512                        # Tk tile target for flash attention


def _round_up(x, m):
    return ((x + m - 1) // m) * m


def _largest_divisor_tile(n, target, align):
    """Largest multiple of `align` that divides n and is <= target (else n)."""
    if n <= target:
        return n
    t = (target // align) * align
    while t >= align:
        if n % t == 0:
            return t
        t -= align
    return n


# =============================================================================
# shared in-kernel math helpers (fp32 vector math)
# =============================================================================

def _layer_norm_f32(x, g, b):
    mean = jnp.mean(x, axis=-1, keepdims=True)
    var = jnp.mean((x - mean) ** 2, axis=-1, keepdims=True)
    return (x - mean) * jax.lax.rsqrt(var + 1e-5) * g + b          # torch eps=1e-5


def _gelu_f32(x):
    # exact (erf) GELU, matching torch.nn.GELU default used by Whisper
    return 0.5 * x * (1.0 + jax.lax.erf(x * (2.0 ** -0.5)))


# =============================================================================
# Kernel 1: fused LayerNorm + linear projection, output-N tiled ("parallel").
#           Used for the fused QKV projection and the cross-attention Q.
# =============================================================================

def _ln_linear_kernel(x_ref, g_ref, b_ref, w_ref, bias_ref, o_ref):
    # LN recomputed per N tile; negligible (M is tiny in decode) vs weight DMA.
    h = _layer_norm_f32(x_ref[...], g_ref[...], b_ref[...]).astype(jnp.bfloat16)
    y = jnp.dot(h, w_ref[...], preferred_element_type=jnp.float32) + bias_ref[...]
    o_ref[...] = y.astype(o_ref.dtype)


def ln_linear(x2, g, b, w, bias, *, n_target=_LIN_TILE):
    M, D = x2.shape
    N = w.shape[1]
    tn = _largest_divisor_tile(N, n_target, 128)
    return pl.pallas_call(
        _ln_linear_kernel,
        grid=(N // tn,),
        in_specs=[pl.BlockSpec((M, D), lambda j: (0, 0)),
                  pl.BlockSpec((1, D), lambda j: (0, 0)),
                  pl.BlockSpec((1, D), lambda j: (0, 0)),
                  pl.BlockSpec((D, tn), lambda j: (0, j)),
                  pl.BlockSpec((1, tn), lambda j: (0, j))],
        out_specs=pl.BlockSpec((M, tn), lambda j: (0, j)),
        out_shape=jax.ShapeDtypeStruct((M, N), jnp.bfloat16),
        compiler_params=pltpu.CompilerParams(
            dimension_semantics=("parallel",),
            vmem_limit_bytes=_VMEM_LIMIT),
    )(x2, g, b, w, bias)


# =============================================================================
# Kernel 2: flash-style attention (online softmax), Tk streamed as an
#           "arbitrary" reduction, batch "parallel"; mask built in-kernel.
# =============================================================================

def _flash_attn_kernel(q_ref, k_ref, v_ref, keep_ref, o_ref,
                       m_ref, l_ref, acc_ref, *, causal, past_len):
    kv = pl.program_id(1)

    @pl.when(kv == 0)
    def _():
        m_ref[...] = jnp.full_like(m_ref, _MASK_VALUE)
        l_ref[...] = jnp.zeros_like(l_ref)
        acc_ref[...] = jnp.zeros_like(acc_ref)

    q = q_ref[0]                                   # (H, Tq, Dh) bf16
    k = k_ref[0]                                   # (H, tk, Dh) bf16
    v = v_ref[0]                                   # (H, tk, Dh) bf16
    Tq = q.shape[1]
    tk = k.shape[1]

    s = jnp.einsum('hqd,hkd->hqk', q, k,
                   preferred_element_type=jnp.float32)           # (H, Tq, tk)

    keep = keep_ref[0] > 0                                        # (1, tk)
    if causal:
        qpos = past_len + jax.lax.broadcasted_iota(jnp.int32, (Tq, tk), 0)
        kpos = kv * tk + jax.lax.broadcasted_iota(jnp.int32, (Tq, tk), 1)
        ok = (kpos <= qpos) & keep                                # (Tq, tk)
    else:
        ok = keep                                                 # (1, tk)
    s = jnp.where(ok[None], s, _MASK_VALUE)

    m_prev = m_ref[...]                                           # (H, Tq, 1)
    m_new = jnp.maximum(m_prev, jnp.max(s, axis=-1, keepdims=True))
    alpha = jnp.exp(m_prev - m_new)
    p = jnp.exp(s - m_new)
    l_ref[...] = alpha * l_ref[...] + jnp.sum(p, axis=-1, keepdims=True)
    acc_ref[...] = alpha * acc_ref[...] + jnp.einsum(
        'hqk,hkd->hqd', p.astype(jnp.bfloat16), v,
        preferred_element_type=jnp.float32)
    m_ref[...] = m_new

    @pl.when(kv == pl.num_programs(1) - 1)
    def _():
        ctx = acc_ref[...] * pl.reciprocal(l_ref[...], approx=True)
        o_ref[0] = ctx.astype(o_ref.dtype)


def flash_attn(q, k, v, keep, *, causal, past_len, kv_target=_KV_TILE):
    """q:(B,H,Tq,Dh) bf16  k,v:(B,H,Tk,Dh) bf16  keep:(B,1,Tk) int32
    -> per-head contexts (B,H,Tq,Dh) bf16 (heads merged + projected later)."""
    B, H, Tq, Dh = q.shape
    Tk = k.shape[2]
    tk = _round_up(Tk, 8) if Tk <= kv_target else kv_target
    Tkp = _round_up(Tk, tk)
    if Tkp != Tk:
        pad = Tkp - Tk
        k = jnp.pad(k, ((0, 0), (0, 0), (0, pad), (0, 0)))
        v = jnp.pad(v, ((0, 0), (0, 0), (0, pad), (0, 0)))
        keep = jnp.pad(keep, ((0, 0), (0, 0), (0, pad)))          # pad -> masked
    kern = functools.partial(_flash_attn_kernel, causal=causal, past_len=past_len)
    return pl.pallas_call(
        kern,
        grid=(B, Tkp // tk),
        in_specs=[
            pl.BlockSpec((1, H, Tq, Dh), lambda b, j: (b, 0, 0, 0)),
            pl.BlockSpec((1, H, tk, Dh), lambda b, j: (b, 0, j, 0)),
            pl.BlockSpec((1, H, tk, Dh), lambda b, j: (b, 0, j, 0)),
            pl.BlockSpec((1, 1, tk), lambda b, j: (b, 0, j)),
        ],
        out_specs=pl.BlockSpec((1, H, Tq, Dh), lambda b, j: (b, 0, 0, 0)),
        out_shape=jax.ShapeDtypeStruct((B, H, Tq, Dh), jnp.bfloat16),
        scratch_shapes=[pltpu.VMEM((H, Tq, 1), jnp.float32),
                        pltpu.VMEM((H, Tq, 1), jnp.float32),
                        pltpu.VMEM((H, Tq, Dh), jnp.float32)],
        compiler_params=pltpu.CompilerParams(
            dimension_semantics=("parallel", "arbitrary"),
            vmem_limit_bytes=_VMEM_LIMIT),
    )(q, k, v, keep)


# =============================================================================
# Kernel 3: merged-context output projection + bias + residual
#           (single (M,D)@(D,D) matmul, K = full D; output-N tiled "parallel").
# =============================================================================

def _oproj_residual_kernel(x_ref, w_ref, b_ref, res_ref, o_ref):
    o_ref[...] = (res_ref[...] + b_ref[...]
                  + jnp.dot(x_ref[...], w_ref[...],
                            preferred_element_type=jnp.float32))


def oproj_residual(x_bf16, w, bias, res, *, n_target=_LIN_TILE):
    M, D = x_bf16.shape
    N = w.shape[1]
    tn = _largest_divisor_tile(N, n_target, 128)
    return pl.pallas_call(
        _oproj_residual_kernel,
        grid=(N // tn,),
        in_specs=[pl.BlockSpec((M, D), lambda j: (0, 0)),
                  pl.BlockSpec((D, tn), lambda j: (0, j)),
                  pl.BlockSpec((1, tn), lambda j: (0, j)),
                  pl.BlockSpec((M, tn), lambda j: (0, j))],
        out_specs=pl.BlockSpec((M, tn), lambda j: (0, j)),
        out_shape=jax.ShapeDtypeStruct((M, N), jnp.float32),
        compiler_params=pltpu.CompilerParams(
            dimension_semantics=("parallel",),
            vmem_limit_bytes=_VMEM_LIMIT),
    )(x_bf16, w, bias, res)


# =============================================================================
# Kernel 4: fused LayerNorm + FFN (fc1 -> GELU -> fc2 -> +residual),
#           F streamed as an accumulated reduction (F padded at prep time).
# =============================================================================

def _ln_ffn_kernel(x_ref, g_ref, b_ref, w1_ref, b1_ref, w2_ref, b2_ref,
                   o_ref, h_ref, acc_ref):
    j = pl.program_id(0)

    @pl.when(j == 0)
    def _():
        h_ref[...] = _layer_norm_f32(x_ref[...], g_ref[...],
                                     b_ref[...]).astype(jnp.bfloat16)
        acc_ref[...] = x_ref[...] + b2_ref[...]          # residual + fc2 bias

    a = (jnp.dot(h_ref[...], w1_ref[...],
                 preferred_element_type=jnp.float32) + b1_ref[...])
    a = _gelu_f32(a)
    acc_ref[...] += jnp.dot(a.astype(jnp.bfloat16), w2_ref[...],
                            preferred_element_type=jnp.float32)

    @pl.when(j == pl.num_programs(0) - 1)
    def _():
        o_ref[...] = acc_ref[...]


def ln_ffn(x2, g, b, w1, b1, w2, b2, *, f_target=_FFN_TILE):
    M, D = x2.shape
    Fp = w1.shape[1]                      # padded to a multiple of 256 at prep time
    tf = _largest_divisor_tile(Fp, f_target, 256)
    return pl.pallas_call(
        _ln_ffn_kernel,
        grid=(Fp // tf,),
        in_specs=[pl.BlockSpec((M, D), lambda j: (0, 0)),
                  pl.BlockSpec((1, D), lambda j: (0, 0)),
                  pl.BlockSpec((1, D), lambda j: (0, 0)),
                  pl.BlockSpec((D, tf), lambda j: (0, j)),
                  pl.BlockSpec((1, tf), lambda j: (0, j)),
                  pl.BlockSpec((tf, D), lambda j: (j, 0)),
                  pl.BlockSpec((1, D), lambda j: (0, 0))],
        out_specs=pl.BlockSpec((M, D), lambda j: (0, 0)),
        out_shape=jax.ShapeDtypeStruct((M, D), jnp.float32),
        scratch_shapes=[pltpu.VMEM((M, D), jnp.bfloat16),
                        pltpu.VMEM((M, D), jnp.float32)],
        compiler_params=pltpu.CompilerParams(
            dimension_semantics=("arbitrary",),
            vmem_limit_bytes=_VMEM_LIMIT),
    )(x2, g, b, w1, b1, w2, b2)


# =============================================================================
# Kernel 5: final LayerNorm -> bf16 (computed once, not per vocab tile)
# Kernel 6: weight-tied LM head, vocab streamed in 2048-wide tiles ("parallel"),
#           weight kept UNtransposed (contraction on D): no HBM transpose.
# =============================================================================

def _ln_bf16_kernel(x_ref, g_ref, b_ref, o_ref):
    o_ref[...] = _layer_norm_f32(x_ref[...], g_ref[...],
                                 b_ref[...]).astype(o_ref.dtype)


def ln_final(x2, g, b):
    M, D = x2.shape
    return pl.pallas_call(
        _ln_bf16_kernel,
        grid=(1,),
        in_specs=[pl.BlockSpec((M, D), lambda i: (0, 0)),
                  pl.BlockSpec((1, D), lambda i: (0, 0)),
                  pl.BlockSpec((1, D), lambda i: (0, 0))],
        out_specs=pl.BlockSpec((M, D), lambda i: (0, 0)),
        out_shape=jax.ShapeDtypeStruct((M, D), jnp.bfloat16),
    )(x2, g, b)


def _lmhead_kernel(h_ref, w_ref, o_ref):
    o_ref[...] = jax.lax.dot_general(
        h_ref[...], w_ref[...], dimension_numbers=(((1,), (1,)), ((), ())),
        preferred_element_type=jnp.float32)


def lmhead(h_bf16, w_pad, vocab, *, v_target=_LM_TILE):
    M, D = h_bf16.shape
    Vp = w_pad.shape[0]
    tv = _largest_divisor_tile(Vp, v_target, 256)
    logits = pl.pallas_call(
        _lmhead_kernel,
        grid=(Vp // tv,),
        in_specs=[pl.BlockSpec((M, D), lambda i: (0, 0)),
                  pl.BlockSpec((tv, D), lambda i: (i, 0))],
        out_specs=pl.BlockSpec((M, tv), lambda i: (0, i)),
        out_shape=jax.ShapeDtypeStruct((M, Vp), jnp.float32),
        compiler_params=pltpu.CompilerParams(
            dimension_semantics=("parallel",),
            vmem_limit_bytes=_VMEM_LIMIT),
    )(h_bf16, w_pad)
    return logits[:, :vocab]


PALLAS_OPS = dict(ln_linear=ln_linear, flash_attn=flash_attn,
                  oproj_residual=oproj_residual, ln_ffn=ln_ffn,
                  ln_final=ln_final, lmhead=lmhead)


# =============================================================================
# Pure-JAX reference ops (same math, same bf16 rounding) for correctness check
# =============================================================================

def _ref_ln_linear(x2, g, b, w, bias):
    h = _layer_norm_f32(x2, g, b).astype(jnp.bfloat16)
    return (jnp.dot(h, w, preferred_element_type=jnp.float32)
            + bias).astype(jnp.bfloat16)


def _ref_flash_attn(q, k, v, keep, *, causal, past_len):
    s = jnp.einsum('bhqd,bhkd->bhqk', q, k, preferred_element_type=jnp.float32)
    Tq, Tk = s.shape[2], s.shape[3]
    ok = (keep > 0)[:, :, None, :]                               # (B,1,1,Tk)
    if causal:
        qpos = past_len + jnp.arange(Tq)[:, None]
        kpos = jnp.arange(Tk)[None, :]
        ok = ok & (kpos <= qpos)[None, None]
    s = jnp.where(ok, s, _MASK_VALUE)
    s = s - jnp.max(s, axis=-1, keepdims=True)
    p = jnp.exp(s)
    p = p / jnp.sum(p, axis=-1, keepdims=True)
    ctx = jnp.einsum('bhqk,bhkd->bhqd', p.astype(jnp.bfloat16), v,
                     preferred_element_type=jnp.float32)
    return ctx.astype(jnp.bfloat16)


def _ref_oproj_residual(x_bf16, w, bias, res):
    return res + bias + jnp.dot(x_bf16, w, preferred_element_type=jnp.float32)


def _ref_ln_ffn(x2, g, b, w1, b1, w2, b2):
    h = _layer_norm_f32(x2, g, b).astype(jnp.bfloat16)
    a = jnp.dot(h, w1, preferred_element_type=jnp.float32) + b1
    a = _gelu_f32(a)
    return x2 + b2 + jnp.dot(a.astype(jnp.bfloat16), w2,
                             preferred_element_type=jnp.float32)


def _ref_ln_final(x2, g, b):
    return _layer_norm_f32(x2, g, b).astype(jnp.bfloat16)


def _ref_lmhead(h_bf16, w_pad, vocab):
    logits = jax.lax.dot_general(h_bf16, w_pad,
                                 dimension_numbers=(((1,), (1,)), ((), ())),
                                 preferred_element_type=jnp.float32)
    return logits[:, :vocab]


REF_OPS = dict(ln_linear=_ref_ln_linear, flash_attn=_ref_flash_attn,
               oproj_residual=_ref_oproj_residual, ln_ffn=_ref_ln_ffn,
               ln_final=_ref_ln_final, lmhead=_ref_lmhead)


# =============================================================================
# Whisper decoder forward (mirrors the PyTorch module semantics)
# =============================================================================

def whisper_decoder_forward(ops, prep, num_heads,
                            decoder_input_ids, decoder_attention_mask,
                            encoder_last_hidden_state, position_embeds,
                            past_key_values):
    # encoder_last_hidden_state unused: with a past, HF reuses the cached cross K/V.
    del encoder_last_hidden_state
    bf = jnp.bfloat16
    B, T = decoder_input_ids.shape
    D = prep['embed_tokens'].shape[1]
    H = num_heads
    Dh = D // H
    M = B * T

    inputs_embeds = jnp.take(prep['embed_tokens'], decoder_input_ids, axis=0)
    hidden = (inputs_embeds + position_embeds).astype(jnp.float32)     # (B,T,D)

    past_len = past_key_values[0].shape[2]
    cross_len = past_key_values[2].shape[2]
    # compact per-key keep masks; causal part is built inside the kernel
    self_keep = decoder_attention_mask.astype(jnp.int32)[:, None, :]   # (B,1,P+T)
    cross_keep = jnp.ones((B, 1, cross_len), jnp.int32)

    presents = []
    for i, lp in enumerate(prep['layers']):
        pkv = past_key_values[4 * i: 4 * i + 4]
        pk, pv = pkv[0].astype(bf), pkv[1].astype(bf)       # bf16 KV caches
        ck, cv = pkv[2].astype(bf), pkv[3].astype(bf)

        # ---- self-attention: fused (LN -> QKV), flash attn, fused oproj+res ----
        residual = hidden
        qkv = ops['ln_linear'](hidden.reshape(M, D), lp['sa_ln_g'], lp['sa_ln_b'],
                               lp['qkv_w'], lp['qkv_b'])               # (M,3D) bf16
        qkv = qkv.reshape(B, T, 3, H, Dh)
        q = qkv[:, :, 0].transpose(0, 2, 1, 3)                         # (B,H,T,Dh)
        k = qkv[:, :, 1].transpose(0, 2, 1, 3)
        v = qkv[:, :, 2].transpose(0, 2, 1, 3)
        k_full = jnp.concatenate([pk, k], axis=2)                      # bf16 cache
        v_full = jnp.concatenate([pv, v], axis=2)
        ctx = ops['flash_attn'](q, k_full, v_full, self_keep,
                                causal=True, past_len=past_len)        # (B,H,T,Dh)
        ctx = ctx.transpose(0, 2, 1, 3).reshape(M, D)                  # head merge (XLA)
        hidden = ops['oproj_residual'](ctx, lp['o_w'], lp['o_b'],
                                       residual.reshape(M, D)).reshape(B, T, D)

        # ---- cross-attention: cached cross K/V reused; only Q is projected ----
        residual = hidden
        cq = ops['ln_linear'](hidden.reshape(M, D), lp['ca_ln_g'], lp['ca_ln_b'],
                              lp['cq_w'], lp['cq_b'])                  # (M,D) bf16
        cq = cq.reshape(B, T, H, Dh).transpose(0, 2, 1, 3)
        cctx = ops['flash_attn'](cq, ck, cv, cross_keep,
                                 causal=False, past_len=0)
        cctx = cctx.transpose(0, 2, 1, 3).reshape(M, D)
        hidden = ops['oproj_residual'](cctx, lp['co_w'], lp['co_b'],
                                       residual.reshape(M, D)).reshape(B, T, D)

        # ---- feed-forward: fused LN+fc1+GELU+fc2+residual, F-tiled reduction ----
        hidden = ops['ln_ffn'](hidden.reshape(M, D), lp['f_ln_g'], lp['f_ln_b'],
                               lp['fc1_w'], lp['fc1_b'],
                               lp['fc2_w'], lp['fc2_b']).reshape(B, T, D)

        presents.append((k_full, v_full, ck, cv))

    # ---- final LN (once, bf16) + weight-tied LM head (vocab-tiled) ----
    h_ln = ops['ln_final'](hidden.reshape(M, D), prep['ln_f_g'], prep['ln_f_b'])
    logits = ops['lmhead'](h_ln, prep['lm_w'], prep['vocab'])
    return (logits.reshape(B, T, prep['vocab']), *presents)


# =============================================================================
# Parameter construction / preparation
# =============================================================================

def init_params(key, num_layers, vocab, D, F):
    n_per_layer = 16
    keys = iter(jax.random.split(key, 2 + num_layers * n_per_layer))

    def w(shape, scale=0.02):
        return (scale * jax.random.normal(next(keys), shape)).astype(jnp.float32)

    params = {
        'embed_tokens': w((vocab, D)),
        'ln_f_g': jnp.ones((D,), jnp.float32),
        'ln_f_b': jnp.zeros((D,), jnp.float32),
        'layers': [],
    }
    for _ in range(num_layers):
        lp = {
            'sa_ln_g': jnp.ones((D,), jnp.float32), 'sa_ln_b': jnp.zeros((D,), jnp.float32),
            'q_w': w((D, D)), 'q_b': w((D,)),
            'k_w': w((D, D)),                                 # k_proj has no bias
            'v_w': w((D, D)), 'v_b': w((D,)),
            'o_w': w((D, D)), 'o_b': w((D,)),
            'ca_ln_g': jnp.ones((D,), jnp.float32), 'ca_ln_b': jnp.zeros((D,), jnp.float32),
            'cq_w': w((D, D)), 'cq_b': w((D,)),
            'co_w': w((D, D)), 'co_b': w((D,)),
            'f_ln_g': jnp.ones((D,), jnp.float32), 'f_ln_b': jnp.zeros((D,), jnp.float32),
            'fc1_w': w((D, F)), 'fc1_b': w((F,)),
            'fc2_w': w((F, D)), 'fc2_b': w((D,)),
        }
        params['layers'].append(lp)
    return params


def prepare_params(params, num_heads):
    """One-time prep: fuse QKV, fold the 1/sqrt(Dh) scaling into the Q weights,
    cast MXU weights to bf16 (o_w kept flat (D,D)), pad F and vocab to tile
    multiples, reshape biases / LN params."""
    bf = jnp.bfloat16
    V, D = params['embed_tokens'].shape
    H = num_heads
    Dh = D // H
    scaling = Dh ** -0.5

    Vp = _round_up(V, _LM_TILE) if V > _LM_TILE else _round_up(V, 256)
    lm_w = params['embed_tokens']
    if Vp != V:
        lm_w = jnp.pad(lm_w, ((0, Vp - V), (0, 0)))

    prep = {
        'embed_tokens': params['embed_tokens'],               # f32, for the gather
        'lm_w': lm_w.astype(bf),                              # (Vp, D), untransposed
        'vocab': V,
        'ln_f_g': params['ln_f_g'].reshape(1, D),
        'ln_f_b': params['ln_f_b'].reshape(1, D),
        'layers': [],
    }
    for lp in params['layers']:
        F = lp['fc1_w'].shape[1]
        Fp = _round_up(F, 256)
        fc1_w, fc1_b, fc2_w = lp['fc1_w'], lp['fc1_b'], lp['fc2_w']
        if Fp != F:
            fc1_w = jnp.pad(fc1_w, ((0, 0), (0, Fp - F)))
            fc1_b = jnp.pad(fc1_b, ((0, Fp - F),))
            fc2_w = jnp.pad(fc2_w, ((0, Fp - F), (0, 0)))
        zeros_k = jnp.zeros((D,), jnp.float32)
        qkv_w = jnp.concatenate([lp['q_w'] * scaling, lp['k_w'], lp['v_w']],
                                axis=1).astype(bf)            # (D, 3D)
        qkv_b = jnp.concatenate([lp['q_b'] * scaling, zeros_k,
                                 lp['v_b']]).reshape(1, 3 * D)
        prep['layers'].append({
            'sa_ln_g': lp['sa_ln_g'].reshape(1, D), 'sa_ln_b': lp['sa_ln_b'].reshape(1, D),
            'qkv_w': qkv_w, 'qkv_b': qkv_b,
            'o_w': lp['o_w'].astype(bf), 'o_b': lp['o_b'].reshape(1, D),   # flat (D,D)
            'ca_ln_g': lp['ca_ln_g'].reshape(1, D), 'ca_ln_b': lp['ca_ln_b'].reshape(1, D),
            'cq_w': (lp['cq_w'] * scaling).astype(bf),
            'cq_b': (lp['cq_b'] * scaling).reshape(1, D),
            'co_w': lp['co_w'].astype(bf), 'co_b': lp['co_b'].reshape(1, D),
            'f_ln_g': lp['f_ln_g'].reshape(1, D), 'f_ln_b': lp['f_ln_b'].reshape(1, D),
            'fc1_w': fc1_w.astype(bf), 'fc1_b': fc1_b.reshape(1, Fp),
            'fc2_w': fc2_w.astype(bf), 'fc2_b': lp['fc2_b'].reshape(1, D),
        })
    return prep


# =============================================================================
# Main
# =============================================================================

if __name__ == "__main__":
    B, T, P, S = 2, 8, 8, 16             # batch, new tokens, past length, encoder seq
    D, H, F, V, L = 128, 4, 512, 500, 2  # d_model, heads, ffn, vocab, layers
    Dh = D // H

    key = jax.random.PRNGKey(0)
    kp, k1, k2, k3, k4 = jax.random.split(key, 5)
    params = init_params(kp, L, V, D, F)
    prep = prepare_params(params, H)

    decoder_input_ids = jax.random.randint(k1, (B, T), 0, V)
    decoder_attention_mask = jnp.ones((B, P + T), jnp.int32)
    encoder_last_hidden_state = jax.random.normal(k2, (B, S, D), jnp.float32)
    position_embeds = (0.02 * jax.random.normal(k3, (T, D))).astype(jnp.float32)

    past_key_values = []
    for i in range(L):
        lkeys = jax.random.split(jax.random.fold_in(k4, i), 4)
        past_key_values += [
            0.1 * jax.random.normal(lkeys[0], (B, H, P, Dh), jnp.float32),  # self K
            0.1 * jax.random.normal(lkeys[1], (B, H, P, Dh), jnp.float32),  # self V
            0.1 * jax.random.normal(lkeys[2], (B, H, S, Dh), jnp.float32),  # cross K
            0.1 * jax.random.normal(lkeys[3], (B, H, S, Dh), jnp.float32),  # cross V
        ]

    out_pallas = whisper_decoder_forward(
        PALLAS_OPS, prep, H, decoder_input_ids, decoder_attention_mask,
        encoder_last_hidden_state, position_embeds, past_key_values)
    jax.block_until_ready(out_pallas)

    # correctness check against a pure-JAX reference of the same (bf16-MXU) math;
    # tolerance covers the approximate-EUP reciprocal + online-softmax ordering.
    out_ref = whisper_decoder_forward(
        REF_OPS, prep, H, decoder_input_ids, decoder_attention_mask,
        encoder_last_hidden_state, position_embeds, past_key_values)
    err = float(jnp.max(jnp.abs(out_pallas[0] - out_ref[0])))
    assert err < 1e-2, f"mismatch vs reference: {err}"

    assert out_pallas[0].shape == (B, T, V)
    assert len(out_pallas) == 1 + L
    print("KERNEL_OK")
</pallas_src>

<mosaic_0001>
module attributes {stable_mosaic.version = 11 : i64} {
  func.func @_ln_linear_kernel(%arg0: i32, %arg1: memref<16x128xf32, #tpu.memory_space<vmem>>, %arg2: memref<1x128xf32, #tpu.memory_space<vmem>>, %arg3: memref<1x128xf32, #tpu.memory_space<vmem>>, %arg4: memref<128x384xbf16, #tpu.memory_space<vmem>>, %arg5: memref<1x384xf32, #tpu.memory_space<vmem>>, %arg6: memref<16x384xbf16, #tpu.memory_space<vmem>>) attributes {dimension_semantics = [#tpu.dimension_semantics<parallel>], iteration_bounds = array<i64: 1>, scalar_prefetch = 0 : i64, scratch_operands = 0 : i64, tpu.core_type = #tpu.core_type<tc>, window_params = [{pipeline_mode = #tpu.pipeline_mode<synchronous>, transform_indices = @transform_0, window_bounds = array<i64: 16, 128>}, {pipeline_mode = #tpu.pipeline_mode<synchronous>, transform_indices = @transform_1, window_bounds = array<i64: 1, 128>}, {pipeline_mode = #tpu.pipeline_mode<synchronous>, transform_indices = @transform_2, window_bounds = array<i64: 1, 128>}, {transform_indices = @transform_3, window_bounds = array<i64: 128, 384>}, {transform_indices = @transform_4, window_bounds = array<i64: 1, 384>}, {transform_indices = @transform_5, window_bounds = array<i64: 16, 384>}]} {
    %c0 = arith.constant 0 : index
    %c0_0 = arith.constant 0 : index
    %0 = vector.load %arg1[%c0, %c0_0] : memref<16x128xf32, #tpu.memory_space<vmem>>, vector<16x128xf32>
    %c0_1 = arith.constant 0 : index
    %c0_2 = arith.constant 0 : index
    %1 = vector.load %arg2[%c0_1, %c0_2] : memref<1x128xf32, #tpu.memory_space<vmem>>, vector<1x128xf32>
    %c0_3 = arith.constant 0 : index
    %c0_4 = arith.constant 0 : index
    %2 = vector.load %arg3[%c0_3, %c0_4] : memref<1x128xf32, #tpu.memory_space<vmem>>, vector<1x128xf32>
    %cst = arith.constant dense<0.000000e+00> : vector<16xf32>
    %3 = vector.multi_reduction <add>, %0, %cst [1] : vector<16x128xf32> to vector<16xf32>
    %4 = vector.shape_cast %3 : vector<16xf32> to vector<16x1xf32>
    %cst_5 = arith.constant 1.280000e+02 : f32
    %5 = vector.broadcast %cst_5 : f32 to vector<16x1xf32>
    %6 = arith.divf %4, %5 : vector<16x1xf32>
    %7 = vector.broadcast %6 : vector<16x1xf32> to vector<16x128xf32>
    %8 = arith.subf %0, %7 : vector<16x128xf32>
    %9 = arith.mulf %8, %8 : vector<16x128xf32>
    %cst_6 = arith.constant dense<0.000000e+00> : vector<16xf32>
    %10 = vector.multi_reduction <add>, %9, %cst_6 [1] : vector<16x128xf32> to vector<16xf32>
    %11 = vector.shape_cast %10 : vector<16xf32> to vector<16x1xf32>
    %cst_7 = arith.constant 1.280000e+02 : f32
    %12 = vector.broadcast %cst_7 : f32 to vector<16x1xf32>
    %13 = arith.divf %11, %12 : vector<16x1xf32>
    %14 = vector.broadcast %6 : vector<16x1xf32> to vector<16x128xf32>
    %15 = arith.subf %0, %14 : vector<16x128xf32>
    %cst_8 = arith.constant 9.99999974E-6 : f32
    %16 = vector.broadcast %cst_8 : f32 to vector<16x1xf32>
    %17 = arith.addf %13, %16 : vector<16x1xf32>
    %18 = math.rsqrt %17 : vector<16x1xf32>
    %19 = vector.broadcast %18 : vector<16x1xf32> to vector<16x128xf32>
    %20 = arith.mulf %15, %19 : vector<16x128xf32>
    %21 = vector.broadcast %1 : vector<1x128xf32> to vector<16x128xf32>
    %22 = arith.mulf %20, %21 : vector<16x128xf32>
    %23 = vector.broadcast %2 : vector<1x128xf32> to vector<16x128xf32>
    %24 = arith.addf %22, %23 : vector<16x128xf32>
    %25 = arith.truncf %24 : vector<16x128xf32> to vector<16x128xbf16>
    %c0_9 = arith.constant 0 : index
    %c0_10 = arith.constant 0 : index
    %26 = vector.load %arg4[%c0_9, %c0_10] : memref<128x384xbf16, #tpu.memory_space<vmem>>, vector<128x384xbf16>
    %cst_11 = arith.constant dense<0.000000e+00> : vector<16x384xf32>
    %27 = tpu.matmul %25, %26, %cst_11 {dimension_numbers = #tpu.dot_dimension_numbers<[1], [0], [0], [1], [0, 0, 1, 1], [], []>} : vector<16x128xbf16>, vector<128x384xbf16>, vector<16x384xf32> -> vector<16x384xf32>
    %c0_12 = arith.constant 0 : index
    %c0_13 = arith.constant 0 : index
    %28 = vector.load %arg5[%c0_12, %c0_13] : memref<1x384xf32, #tpu.memory_space<vmem>>, vector<1x384xf32>
    %29 = vector.broadcast %28 : vector<1x384xf32> to vector<16x384xf32>
    %30 = arith.addf %27, %29 : vector<16x384xf32>
    %31 = arith.truncf %30 : vector<16x384xf32> to vector<16x384xbf16>
    %c0_14 = arith.constant 0 : index
    %c0_15 = arith.constant 0 : index
    %32 = vector.load %arg6[%c0_14, %c0_15] : memref<16x384xbf16, #tpu.memory_space<vmem>>, vector<16x384xbf16>
    tpu.vector_store %arg6[%c0_14, %c0_15], %31 {strides = array<i32>} : memref<16x384xbf16, #tpu.memory_space<vmem>>, vector<16x384xbf16>,
    return
  }
  func.func @transform_0(%arg0: i32) -> (i32, i32) {
    %c0_i32 = arith.constant 0 : i32
    %c0_i32_0 = arith.constant 0 : i32
    %c0_i32_1 = arith.constant 0 : i32
    return %c0_i32, %c0_i32_0 : i32, i32
  }
  func.func @transform_1(%arg0: i32) -> (i32, i32) {
    %c0_i32 = arith.constant 0 : i32
    %c0_i32_0 = arith.constant 0 : i32
    %c0_i32_1 = arith.constant 0 : i32
    return %c0_i32, %c0_i32_0 : i32, i32
  }
  func.func @transform_2(%arg0: i32) -> (i32, i32) {
    %c0_i32 = arith.constant 0 : i32
    %c0_i32_0 = arith.constant 0 : i32
    %c0_i32_1 = arith.constant 0 : i32
    return %c0_i32, %c0_i32_0 : i32, i32
  }
  func.func @transform_3(%arg0: i32) -> (i32, i32) {
    %c0_i32 = arith.constant 0 : i32
    %c0_i32_0 = arith.constant 0 : i32
    return %c0_i32, %arg0 : i32, i32
  }
  func.func @transform_4(%arg0: i32) -> (i32, i32) {
    %c0_i32 = arith.constant 0 : i32
    %c0_i32_0 = arith.constant 0 : i32
    return %c0_i32, %arg0 : i32, i32
  }
  func.func @transform_5(%arg0: i32) -> (i32, i32) {
    %c0_i32 = arith.constant 0 : i32
    %c0_i32_0 = arith.constant 0 : i32
    return %c0_i32, %arg0 : i32, i32
  }
}

</mosaic_0001>

<llo_original>
// kernel: tpu_custom_call.1
$region0: #{tpu_custom_call.1}
  #allocation0 [shape = 'u32[]', space=smem, size = 0x4, offset = 0x4, fixed_abs, tag = 'smem constant byte address 0x4 - core index']
  #allocation1 [shape = 'u32[144,128]{1,0:T(1,128)}', space=vmem, size = 0x12000, scoped, tag = 'internal scratch']
  %s0 = inlined_call_operand.hbm [shape: f32[16,128], index: 0, kind: input, shape index: {}]
  %s1 = inlined_call_operand.vmem [shape: f32[1,128], index: 1, kind: input, shape index: {}]
  %s2 = inlined_call_operand.vmem [shape: f32[1,128], index: 2, kind: input, shape index: {}]
  %s3 = inlined_call_operand.hbm [shape: bf16[128,384], index: 3, kind: input, shape index: {}]
  %s4 = inlined_call_operand.vmem [shape: f32[1,384], index: 4, kind: input, shape index: {}]
  %s5 = inlined_call_operand.hbm [shape: bf16[16,384], index: 5, kind: output, shape index: {}]
  %s6 = sld [smem:[#allocation0]]
  $region38: #{tpu_custom_call.1} parent=0
    _
  %s8 = ssub.s32 1, %s6
  %s9 = scalar_select 0, %s8, %s6
  $region1: #{tpu_custom_call.1} parent=0
    #allocation2 [shape = 'u8[8192]{0}', space=vmem, size = 0x2000, scoped, tag = 'input window, operand 0, single buffered']
    #allocation3 [shape = 's32[1]{0}', space=sflag, size = 0x4, scoped, tag = 'scoped memory for tpu_custom_call.1']
    #allocation4 [shape = 's32[1]{0}', space=sflag, size = 0x4, scoped, tag = 'scoped memory for tpu_custom_call.1']
    #allocation5 [shape = 'u8[98304]{0}', space=vmem, size = 0x18000, scoped, tag = 'input window, operand 3, single buffered']
    #allocation6 [shape = 's32[1]{0}', space=sflag, size = 0x4, scoped, tag = 'scoped memory for tpu_custom_call.1']
    #allocation7 [shape = 'u8[12288]{0}', space=vmem, size = 0x3000, scoped, tag = 'output window, operand 0, single buffered']
    %10 = vsyncpa [#allocation3], 0
    %11 = vsyncpa [#allocation6], 0
    %12 = vsyncpa [#allocation4], 0
    // Predicated region
    $region2: #{tpu_custom_call.1} parent=1 // pred_check
      _
    $region3: #{tpu_custom_call.1} parent=1 // pred_check_branch
      %14 = sbr.rel (0) target = $region5
    $region4: #{tpu_custom_call.1} parent=1 // pred_region
      %s16 = ssub.s32 256, 256
      %17 = vsyncadd [#allocation3], %s16
      %s18 = sshll.u32 [#allocation2], 4
      %s19 = int_to_ptr.vmem [resolvable:$true] %s18
      %24 = dma.hbm_to_vmem [thread:$0]  %s0, 256, %s19, [#allocation3], 128, 128, 8
    $region5: #{tpu_custom_call.1} parent=1 // pred_fallthru
      _
    // Predicated region
    $region6: #{tpu_custom_call.1} parent=1 // pred_check
      _
    $region7: #{tpu_custom_call.1} parent=1 // pred_check_branch
      %26 = sbr.rel (0) target = $region9
    $region8: #{tpu_custom_call.1} parent=1 // pred_region
      _
    $region9: #{tpu_custom_call.1} parent=1 // pred_fallthru
      _
    // Predicated region
    $region10: #{tpu_custom_call.1} parent=1 // pred_check
      _
    $region11: #{tpu_custom_call.1} parent=1 // pred_check_branch
      %28 = sbr.rel (0) target = $region13
    $region12: #{tpu_custom_call.1} parent=1 // pred_region
      _
    $region13: #{tpu_custom_call.1} parent=1 // pred_fallthru
      _
    // Predicated region
    $region14: #{tpu_custom_call.1} parent=1 // pred_check
      _
    $region15: #{tpu_custom_call.1} parent=1 // pred_check_branch
      %30 = sbr.rel (0) target = $region17
    $region16: #{tpu_custom_call.1} parent=1 // pred_region
      %s32 = ssub.s32 3072, 3072
      %33 = vsyncadd [#allocation6], %s32
      %s34 = sshll.u32 [#allocation5], 4
      %s35 = int_to_ptr.vmem [resolvable:$true] %s34
      %40 = dma.hbm_to_vmem [thread:$0]  %s3, 3072, %s35, [#allocation6], 192, 192, 12
    $region17: #{tpu_custom_call.1} parent=1 // pred_fallthru
      _
    // Predicated region
    $region18: #{tpu_custom_call.1} parent=1 // pred_check
      _
    $region19: #{tpu_custom_call.1} parent=1 // pred_check_branch
      %42 = sbr.rel (0) target = $region21
    $region20: #{tpu_custom_call.1} parent=1 // pred_region
      _
    $region21: #{tpu_custom_call.1} parent=1 // pred_fallthru
      _
    // Predicated region
    $region22: #{tpu_custom_call.1} parent=1 // pred_check
      _
    $region23: #{tpu_custom_call.1} parent=1 // pred_check_branch
      %44 = sbr.rel (0) target = $region25
    $region24: #{tpu_custom_call.1} parent=1 // pred_region
      %45 = dma.done [#allocation3], 256
    $region25: #{tpu_custom_call.1} parent=1 // pred_fallthru
      _
    // Predicated region
    $region26: #{tpu_custom_call.1} parent=1 // pred_check
      _
    $region27: #{tpu_custom_call.1} parent=1 // pred_check_branch
      %47 = sbr.rel (0) target = $region29
    $region28: #{tpu_custom_call.1} parent=1 // pred_region
      %48 = dma.done [#allocation6], 3072
    $region29: #{tpu_custom_call.1} parent=1 // pred_fallthru
      _
    %v50 = vld [vmem:[#allocation2] sm:$0xff]
    %v51 = vld [vmem:[#allocation2 + $0x8] sm:$0xff]
    %v52 = vld [vmem:[%s1] sm:$0x1]
    %v53 = vld [vmem:[%s2] sm:$0x1]
    %54 = vadd.xlane.f32.xlu0 %v50
    %v55 = vpop.xlane.xlu0 %54
    %56 = vadd.xlane.f32.xlu0 %v51
    %v57 = vpop.xlane.xlu0 %56
    %v58 = vrcp.pop 128.0
    %v59 = vmul.f32 %v55, %v58
    %v60 = vmul.f32 %v57, %v58
    %v61 = vsub.f32 %v50, %v59
    %v62 = vsub.f32 %v51, %v60
    %v63 = vmul.f32 %v61, %v61
    %v64 = vmul.f32 %v62, %v62
    %65 = vadd.xlane.f32.xlu0 %v63
    %v66 = vpop.xlane.xlu0 %65
    %67 = vadd.xlane.f32.xlu0 %v64
    %v68 = vpop.xlane.xlu0 %67
    %v69 = vmul.f32 %v66, %v58
    %v70 = vmul.f32 %v68, %v58
    %v71 = vadd.f32 %v69, 1e-05
    %v72 = vadd.f32 %v70, 1e-05
    %v73 = vrsqrt.pop %v71
    %v74 = vrsqrt.pop %v72
    %v75 = vmul.f32 %v61, %v73
    %v76 = vmul.f32 %v62, %v74
    %v78 = vlaneseq
    %v79 = vshrl.u32 %v78, 7
    %v80 = vsub.s32 0, %v79
    %v81 = vrot.slane %v52, %v80
    %v83 = vmul.f32 %v75, %v81
    %v84 = vmul.f32 %v76, %v81
    %v86 = vlaneseq
    %v87 = vshrl.u32 %v86, 7
    %v88 = vsub.s32 0, %v87
    %v89 = vrot.slane %v53, %v88
    %v91 = vadd.f32 %v83, %v89
    %v92 = vadd.f32 %v84, %v89
    %v93 = vpack.c.bf16 %v92, %v91
    %v94 = vld [vmem:[#allocation5] sm:$0xff]
    %v95 = vld [vmem:[#allocation5 + $0x8] sm:$0xf]
    %v96 = vld [vmem:[#allocation5 + $0xc] sm:$0xff]
    %v97 = vld [vmem:[#allocation5 + $0x14] sm:$0xf]
    %v98 = vld [vmem:[#allocation5 + $0x18] sm:$0xff]
    %v99 = vld [vmem:[#allocation5 + $0x20] sm:$0xf]
    %v100 = vld [vmem:[#allocation5 + $0x24] sm:$0xff]
    %v101 = vld [vmem:[#allocation5 + $0x2c] sm:$0xf]
    %v102 = vld [vmem:[#allocation5 + $0x30] sm:$0xff]
    %v103 = vld [vmem:[#allocation5 + $0x38] sm:$0xf]
    %v104 = vld [vmem:[#allocation5 + $0x3c] sm:$0xff]
    %v105 = vld [vmem:[#allocation5 + $0x44] sm:$0xf]
    %v106 = vld [vmem:[#allocation5 + $0x48] sm:$0xff]
    %v107 = vld [vmem:[#allocation5 + $0x50] sm:$0xf]
    %v108 = vld [vmem:[#allocation5 + $0x54] sm:$0xff]
    %v109 = vld [vmem:[#allocation5 + $0x5c] sm:$0xf]
    %v110 = vld [vmem:[#allocation5 + $0x60] sm:$0xff]
    %v111 = vld [vmem:[#allocation5 + $0x68] sm:$0xf]
    %v112 = vld [vmem:[#allocation5 + $0x6c] sm:$0xff]
    %v113 = vld [vmem:[#allocation5 + $0x74] sm:$0xf]
    %v114 = vld [vmem:[#allocation5 + $0x78] sm:$0xff]
    %v115 = vld [vmem:[#allocation5 + $0x80] sm:$0xf]
    %v116 = vld [vmem:[#allocation5 + $0x84] sm:$0xff]
    %v117 = vld [vmem:[#allocation5 + $0x8c] sm:$0xf]
    %v118 = vld [vmem:[#allocation5 + $0x90] sm:$0xff]
    %v119 = vld [vmem:[#allocation5 + $0x98] sm:$0xf]
    %v120 = vld [vmem:[#allocation5 + $0x9c] sm:$0xff]
    %v121 = vld [vmem:[#allocation5 + $0xa4] sm:$0xf]
    %v122 = vld [vmem:[#allocation5 + $0xa8] sm:$0xff]
    %v123 = vld [vmem:[#allocation5 + $0xb0] sm:$0xf]
    %v124 = vld [vmem:[#allocation5 + $0xb4] sm:$0xff]
    %v125 = vld [vmem:[#allocation5 + $0xbc] sm:$0xf]
    %v126 = vld [vmem:[%s4] sm:$0x7]
    %v128 = vlaneseq
    %v129 = vshrl.u32 %v128, 7
    %v130 = vsub.s32 0, %v129
    %v131 = vrot.slane %v126, %v130
    %v132 = vlaneseq
    %v133 = vshrl.u32 %v132, 7
    %v134 = vsub.s32 1, %v133
    %v135 = vrot.slane %v126, %v134
    %v136 = vlaneseq
    %v137 = vshrl.u32 %v136, 7
    %v138 = vsub.s32 2, %v137
    %v139 = vrot.slane %v126, %v138
    %v175 = vunpack.c.l.b16 %v94
    %v176 = vunpack.c.h.b16 %v94
    %v177 = vunpack.c.l.b16 %v95
    %v178 = vunpack.c.l.b16 %v96
    %v179 = vunpack.c.h.b16 %v96
    %v180 = vunpack.c.l.b16 %v97
    %v181 = vunpack.c.l.b16 %v98
    %v182 = vunpack.c.h.b16 %v98
    %v183 = vunpack.c.l.b16 %v99
    %v184 = vunpack.c.l.b16 %v100
    %v185 = vunpack.c.h.b16 %v100
    %v186 = vunpack.c.l.b16 %v101
    %v187 = vunpack.c.l.b16 %v102
    %v188 = vunpack.c.h.b16 %v102
    %v189 = vunpack.c.l.b16 %v103
    %v190 = vunpack.c.l.b16 %v104
    %v191 = vunpack.c.h.b16 %v104
    %v192 = vunpack.c.l.b16 %v105
    %v193 = vunpack.c.l.b16 %v106
    %v194 = vunpack.c.h.b16 %v106
    %v195 = vunpack.c.l.b16 %v107
    %v196 = vunpack.c.l.b16 %v108
    %v197 = vunpack.c.h.b16 %v108
    %v198 = vunpack.c.l.b16 %v109
    %v199 = vunpack.c.l.b16 %v110
    %v200 = vunpack.c.h.b16 %v110
    %v201 = vunpack.c.l.b16 %v111
    %v202 = vunpack.c.l.b16 %v112
    %v203 = vunpack.c.h.b16 %v112
    %v204 = vunpack.c.l.b16 %v113
    %v205 = vunpack.c.l.b16 %v114
    %v206 = vunpack.c.h.b16 %v114
    %v207 = vunpack.c.l.b16 %v115
    %v208 = vunpack.c.l.b16 %v116
    %v209 = vunpack.c.h.b16 %v116
    %v210 = vunpack.c.l.b16 %v117
    %v211 = vunpack.c.l.b16 %v118
    %v212 = vunpack.c.h.b16 %v118
    %v213 = vunpack.c.l.b16 %v119
    %v214 = vunpack.c.l.b16 %v120
    %v215 = vunpack.c.h.b16 %v120
    %v216 = vunpack.c.l.b16 %v121
    %v217 = vunpack.c.l.b16 %v122
    %v218 = vunpack.c.h.b16 %v122
    %v219 = vunpack.c.l.b16 %v123
    %v220 = vunpack.c.l.b16 %v124
    %v221 = vunpack.c.h.b16 %v124
    %v222 = vunpack.c.l.b16 %v125
    %v223 = vpack.c.b16 %v178, %v175
    %v224 = vpack.c.b16 %v179, %v176
    %v225 = vpack.c.b16 %v180, %v177
    %v226 = vpack.c.b16 %v184, %v181
    %v227 = vpack.c.b16 %v185, %v182
    %v228 = vpack.c.b16 %v186, %v183
    %v229 = vpack.c.b16 %v190, %v187
    %v230 = vpack.c.b16 %v191, %v188
    %v231 = vpack.c.b16 %v192, %v189
    %v232 = vpack.c.b16 %v196, %v193
    %v233 = vpack.c.b16 %v197, %v194
    %v234 = vpack.c.b16 %v198, %v195
    %v235 = vpack.c.b16 %v202, %v199
    %v236 = vpack.c.b16 %v203, %v200
    %v237 = vpack.c.b16 %v204, %v201
    %v238 = vpack.c.b16 %v208, %v205
    %v239 = vpack.c.b16 %v209, %v206
    %v240 = vpack.c.b16 %v210, %v207
    %v241 = vpack.c.b16 %v214, %v211
    %v242 = vpack.c.b16 %v215, %v212
    %v243 = vpack.c.b16 %v216, %v213
    %v244 = vpack.c.b16 %v220, %v217
    %v245 = vpack.c.b16 %v221, %v218
    %v246 = vpack.c.b16 %v222, %v219
    %271 = vmatprep.subr.bf16.mxu0 %v224
    %272 = vmatpush1.bf16.msra.mxu0 %v223
    %273 = vmatprep.subr.bf16.mxu0 %v227
    %274 = vmatpush1.bf16.msra.mxu0 %v226
    %275 = vmatprep.subr.bf16.mxu0 %v230
    %276 = vmatpush1.bf16.msra.mxu0 %v229
    %277 = vmatprep.subr.bf16.mxu0 %v233
    %278 = vmatpush1.bf16.msra.mxu0 %v232
    %279 = vmatprep.subr.bf16.mxu0 %v236
    %280 = vmatpush1.bf16.msra.mxu0 %v235
    %281 = vmatprep.subr.bf16.mxu0 %v239
    %282 = vmatpush1.bf16.msra.mxu0 %v238
    %283 = vmatprep.subr.bf16.mxu0 %v242
    %284 = vmatpush1.bf16.msra.mxu0 %v241
    %285 = vmatprep.subr.bf16.mxu0 %v245
    %286 = vmatpush1.bf16.msra.mxu0 %v244
    %287 = vmatprep.subr.bf16.mxu0 0
    %288 = vmatpush1.bf16.msra.mxu0 0
    %289 = vmatprep.subr.bf16.mxu0 0
    %290 = vmatpush1.bf16.msra.mxu0 0
    %291 = vmatprep.subr.bf16.mxu0 0
    %292 = vmatpush1.bf16.msra.mxu0 0
    %293 = vmatprep.subr.bf16.mxu0 0
    %294 = vmatpush1.bf16.msra.mxu0 0
    %295 = vmatprep.subr.bf16.mxu0 0
    %296 = vmatpush1.bf16.msra.mxu0 0
    %297 = vmatprep.subr.bf16.mxu0 0
    %298 = vmatpush1.bf16.msra.mxu0 0
    %299 = vmatprep.subr.bf16.mxu0 0
    %300 = vmatpush1.bf16.msra.mxu0 0
    %301 = vmatprep.subr.bf16.mxu0 0
    %302 = vmatpush1.bf16.msra.mxu0 0
    %303 = vmatprep.mubr.bf16.mxu0 0
    %304 = vmatmul.mubr.bf16.gmra.mrb[0].mxu0 %v93
    %v305 = vpop.f32.mrb[0].mxu0
    %v306 = vadd.f32 %v131, %v305
    %v307 = vpop.f32.mrb[0].mxu0
    %v308 = vadd.f32 %v135, %v307
    %v309 = vpop.f32.mrb[0].mxu0
    %v310 = vadd.f32 %v131, %v309
    %v311 = vpop.f32.mrb[0].mxu0
    %v312 = vadd.f32 %v135, %v311
    %313 = vdwg.mxu0
    %314 = vmatprep.subr.bf16.mxu0 0
    %315 = vmatpush1.bf16.msra.mxu0 %v225
    %316 = vmatprep.subr.bf16.mxu0 0
    %317 = vmatpush1.bf16.msra.mxu0 %v228
    %318 = vmatprep.subr.bf16.mxu0 0
    %319 = vmatpush1.bf16.msra.mxu0 %v231
    %320 = vmatprep.subr.bf16.mxu0 0
    %321 = vmatpush1.bf16.msra.mxu0 %v234
    %322 = vmatprep.subr.bf16.mxu0 0
    %323 = vmatpush1.bf16.msra.mxu0 %v237
    %324 = vmatprep.subr.bf16.mxu0 0
    %325 = vmatpush1.bf16.msra.mxu0 %v240
    %326 = vmatprep.subr.bf16.mxu0 0
    %327 = vmatpush1.bf16.msra.mxu0 %v243
    %328 = vmatprep.subr.bf16.mxu0 0
    %329 = vmatpush1.bf16.msra.mxu0 %v246
    %330 = vmatprep.subr.bf16.mxu0 0
    %331 = vmatpush1.bf16.msra.mxu0 0
    %332 = vmatprep.subr.bf16.mxu0 0
    %333 = vmatpush1.bf16.msra.mxu0 0
    %334 = vmatprep.subr.bf16.mxu0 0
    %335 = vmatpush1.bf16.msra.mxu0 0
    %336 = vmatprep.subr.bf16.mxu0 0
    %337 = vmatpush1.bf16.msra.mxu0 0
    %338 = vmatprep.subr.bf16.mxu0 0
    %339 = vmatpush1.bf16.msra.mxu0 0
    %340 = vmatprep.subr.bf16.mxu0 0
    %341 = vmatpush1.bf16.msra.mxu0 0
    %342 = vmatprep.subr.bf16.mxu0 0
    %343 = vmatpush1.bf16.msra.mxu0 0
    %344 = vmatprep.subr.bf16.mxu0 0
    %345 = vmatpush1.bf16.msra.mxu0 0
    %346 = vmatprep.mubr.bf16.mxu0 0
    %347 = vmatmul.mubr.bf16.gmra.mrb[0].mxu0 %v93
    %v348 = vpop.f32.mrb[0].mxu0
    %v349 = vadd.f32 %v139, %v348
    %v350 = vpop.f32.mrb[0].mxu0
    %v351 = vpop.f32.mrb[0].mxu0
    %v352 = vadd.f32 %v139, %v351
    %v353 = vpop.f32.mrb[0].mxu0
    %354 = vdwg.mxu0
    %v355 = vpack.c.bf16 %v310, %v306
    %v356 = vpack.c.bf16 %v312, %v308
    %v357 = vpack.c.bf16 %v352, %v349
    %v361 = vunpack.c.l.b16 %v355
    %v362 = vunpack.c.l.b16 %v356
    %v363 = vunpack.c.l.b16 %v357
    %v364 = vunpack.c.h.b16 %v355
    %v365 = vunpack.c.h.b16 %v356
    %v366 = vunpack.c.h.b16 %v357
    %v367 = vpack.c.b16 %v362, %v361
    %v368 = vpack.c.b16 %v363, %v363
    %v369 = vpack.c.b16 %v365, %v364
    %v370 = vpack.c.b16 %v366, %v366
    %375 = vst [vmem:[#allocation7] sm:$0xff] %v367
    %376 = vst [vmem:[#allocation7 + $0x8] sm:$0xf] %v368
    %377 = vst [vmem:[#allocation7 + $0xc] sm:$0xff] %v369
    %378 = vst [vmem:[#allocation7 + $0x14] sm:$0xf] %v370
    // Predicated region
    $region30: #{tpu_custom_call.1} parent=1 // pred_check
      _
    $region31: #{tpu_custom_call.1} parent=1 // pred_check_branch
      %380 = sbr.rel (0) target = $region33
    $region32: #{tpu_custom_call.1} parent=1 // pred_region
      %s382 = ssub.s32 384, 384
      %383 = vsyncadd [#allocation4], %s382
      %s384 = sshll.u32 [#allocation7], 4
      %s385 = int_to_ptr.vmem [resolvable:$true] %s384
      %390 = dma.vmem_to_hbm [thread:$0]  %s385, 384, %s5, [#allocation4], 192, 192, 12
    $region33: #{tpu_custom_call.1} parent=1 // pred_fallthru
      _
    // Predicated region
    $region34: #{tpu_custom_call.1} parent=1 // pred_check
      _
    $region35: #{tpu_custom_call.1} parent=1 // pred_check_branch
      %392 = sbr.rel (0) target = $region37
    $region36: #{tpu_custom_call.1} parent=1 // pred_region
      %393 = dma.done [#allocation4], 384
    $region37: #{tpu_custom_call.1} parent=1 // pred_fallthru
      _
    %394 = vsyncpa [#allocation3], 1
    %395 = vsyncpa [#allocation6], 1
    %396 = vsyncpa [#allocation4], 1

</llo_original>
